<compile_context>
chip_gen: v7x
topology: tpu7x:2x2x1
jax: 0.10.0
libtpu: 0.0.40
codegen_flags: <defaults>
</compile_context>

<pallas_src>
import jax
import jax.numpy as jnp
from jax.experimental import pallas as pl
from jax.experimental.pallas import tpu as pltpu


def _round_up(x, m):
    return ((x + m - 1) // m) * m


def _mlp_kernel(x_ref, w1_ref, b1_ref, w2_ref, b2_ref, o_ref):
    # x tile (TB, hist_dim); weights already bf16 and resident in VMEM.
    x = x_ref[...].astype(jnp.bfloat16)
    # Linear 1 (MXU, f32 accumulate) + bias + ReLU (VPU).
    h = jnp.dot(x, w1_ref[...], preferred_element_type=jnp.float32) + b1_ref[...]
    h = jnp.maximum(h, 0.0).astype(jnp.bfloat16)
    # Linear 2 (MXU, f32 accumulate) + bias.
    out = jnp.dot(h, w2_ref[...], preferred_element_type=jnp.float32) + b2_ref[...]
    o_ref[...] = out.astype(o_ref.dtype)


def histogram_conditioning(hist, w1, b1, w2, b2, *, block_b=512):
    """hist: (B, hist_dim) f32 -> (B, embed_dim) f32.

    Matches PyTorch Linear->ReLU->Linear with weights stored as
    (in_features, out_features), i.e. out = relu(x @ W1 + b1) @ W2 + b2.
    """
    B, hist_dim = hist.shape
    hidden_dim = w1.shape[1]
    embed_dim = w2.shape[1]

    # Pre-cast weights to bf16 once (halves weight HBM traffic; f32 accumulation in kernel).
    w1_bf = w1.astype(jnp.bfloat16)
    w2_bf = w2.astype(jnp.bfloat16)
    b1 = b1.reshape(1, hidden_dim).astype(jnp.float32)
    b2 = b2.reshape(1, embed_dim).astype(jnp.float32)

    # Batch tile: up to block_b rows per grid step, padded to a sublane multiple of 8.
    tb = min(block_b, _round_up(B, 8))
    b_pad = _round_up(B, tb)
    if b_pad != B:
        hist = jnp.pad(hist, ((0, b_pad - B), (0, 0)))
    grid = (b_pad // tb,)

    flops = 2 * b_pad * (hist_dim * hidden_dim + hidden_dim * embed_dim)
    bytes_accessed = (
        b_pad * hist_dim * hist.dtype.itemsize       # x in
        + w1_bf.size * 2 + w2_bf.size * 2            # bf16 weights (resident)
        + b1.size * 4 + b2.size * 4                  # f32 biases (resident)
        + b_pad * embed_dim * 4                      # out
    )

    out = pl.pallas_call(
        _mlp_kernel,
        out_shape=jax.ShapeDtypeStruct((b_pad, embed_dim), hist.dtype),
        grid=grid,
        in_specs=[
            pl.BlockSpec((tb, hist_dim), lambda i: (i, 0)),          # x: tiled over batch
            pl.BlockSpec((hist_dim, hidden_dim), lambda i: (0, 0)),  # W1: resident
            pl.BlockSpec((1, hidden_dim), lambda i: (0, 0)),         # b1: resident
            pl.BlockSpec((hidden_dim, embed_dim), lambda i: (0, 0)), # W2: resident
            pl.BlockSpec((1, embed_dim), lambda i: (0, 0)),          # b2: resident
        ],
        out_specs=pl.BlockSpec((tb, embed_dim), lambda i: (i, 0)),
        compiler_params=pltpu.CompilerParams(
            dimension_semantics=("parallel",),
        ),
        cost_estimate=pl.CostEstimate(
            flops=flops, transcendentals=0, bytes_accessed=bytes_accessed
        ),
    )(hist, w1_bf, b1, w2_bf, b2)

    return out[:B]


def init_params(key, hist_dim=32, hidden_dim=128, embed_dim=768, dtype=jnp.float32):
    k1, k2, k3, k4 = jax.random.split(key, 4)
    # Deterministic synthetic init (uniform like PyTorch's default Linear init bounds).
    lim1 = 1.0 / jnp.sqrt(hist_dim)
    lim2 = 1.0 / jnp.sqrt(hidden_dim)
    w1 = jax.random.uniform(k1, (hist_dim, hidden_dim), dtype, -lim1, lim1)
    b1 = jax.random.uniform(k2, (1, hidden_dim), dtype, -lim1, lim1)
    w2 = jax.random.uniform(k3, (hidden_dim, embed_dim), dtype, -lim2, lim2)
    b2 = jax.random.uniform(k4, (1, embed_dim), dtype, -lim2, lim2)
    return w1, b1, w2, b2


if __name__ == "__main__":
    key = jax.random.PRNGKey(0)
    kp, kx = jax.random.split(key)

    hist_dim, hidden_dim, embed_dim = 32, 128, 768
    batch = 2  # NOTE: at B=2 the kernel is launch/DMA-overhead dominated; batch many
    #            conditioning calls together in production for real MXU utilization.

    w1, b1, w2, b2 = init_params(kp, hist_dim, hidden_dim, embed_dim)
    hist = jax.random.normal(kx, (batch, hist_dim), jnp.float32)

    out = histogram_conditioning(hist, w1, b1, w2, b2)
    out = jax.block_until_ready(out)

    # Reference check in plain JAX (f32). Kernel uses bf16 matmul operands with
    # f32 accumulation, so allow a modest tolerance.
    ref = jnp.maximum(hist @ w1 + b1, 0.0) @ w2 + b2
    assert out.shape == (batch, embed_dim)
    assert jnp.allclose(out, ref, atol=5e-2, rtol=5e-2), float(jnp.max(jnp.abs(out - ref)))

    print("KERNEL_OK")
</pallas_src>

<mosaic_0001>
module attributes {stable_mosaic.version = 11 : i64} {
  func.func @_mlp_kernel(%arg0: i32, %arg1: memref<8x32xf32, #tpu.memory_space<vmem>>, %arg2: memref<32x128xbf16, #tpu.memory_space<vmem>>, %arg3: memref<1x128xf32, #tpu.memory_space<vmem>>, %arg4: memref<128x768xbf16, #tpu.memory_space<vmem>>, %arg5: memref<1x768xf32, #tpu.memory_space<vmem>>, %arg6: memref<8x768xf32, #tpu.memory_space<vmem>>) attributes {dimension_semantics = [#tpu.dimension_semantics<parallel>], iteration_bounds = array<i64: 1>, scalar_prefetch = 0 : i64, scratch_operands = 0 : i64, tpu.core_type = #tpu.core_type<tc>, window_params = [{transform_indices = @transform_0, window_bounds = array<i64: 8, 32>}, {pipeline_mode = #tpu.pipeline_mode<synchronous>, transform_indices = @transform_1, window_bounds = array<i64: 32, 128>}, {pipeline_mode = #tpu.pipeline_mode<synchronous>, transform_indices = @transform_2, window_bounds = array<i64: 1, 128>}, {pipeline_mode = #tpu.pipeline_mode<synchronous>, transform_indices = @transform_3, window_bounds = array<i64: 128, 768>}, {pipeline_mode = #tpu.pipeline_mode<synchronous>, transform_indices = @transform_4, window_bounds = array<i64: 1, 768>}, {transform_indices = @transform_5, window_bounds = array<i64: 8, 768>}]} {
    %c0 = arith.constant 0 : index
    %c0_0 = arith.constant 0 : index
    %0 = vector.load %arg1[%c0, %c0_0] : memref<8x32xf32, #tpu.memory_space<vmem>>, vector<8x32xf32>
    %1 = arith.truncf %0 : vector<8x32xf32> to vector<8x32xbf16>
    %c0_1 = arith.constant 0 : index
    %c0_2 = arith.constant 0 : index
    %2 = vector.load %arg2[%c0_1, %c0_2] : memref<32x128xbf16, #tpu.memory_space<vmem>>, vector<32x128xbf16>
    %cst = arith.constant dense<0.000000e+00> : vector<8x128xf32>
    %3 = tpu.matmul %1, %2, %cst {dimension_numbers = #tpu.dot_dimension_numbers<[1], [0], [0], [1], [0, 0, 1, 1], [], []>} : vector<8x32xbf16>, vector<32x128xbf16>, vector<8x128xf32> -> vector<8x128xf32>
    %c0_3 = arith.constant 0 : index
    %c0_4 = arith.constant 0 : index
    %4 = vector.load %arg3[%c0_3, %c0_4] : memref<1x128xf32, #tpu.memory_space<vmem>>, vector<1x128xf32>
    %5 = vector.broadcast %4 : vector<1x128xf32> to vector<8x128xf32>
    %6 = arith.addf %3, %5 : vector<8x128xf32>
    %cst_5 = arith.constant 0.000000e+00 : f32
    %7 = vector.broadcast %cst_5 : f32 to vector<8x128xf32>
    %8 = arith.maximumf %6, %7 : vector<8x128xf32>
    %9 = arith.truncf %8 : vector<8x128xf32> to vector<8x128xbf16>
    %c0_6 = arith.constant 0 : index
    %c0_7 = arith.constant 0 : index
    %10 = vector.load %arg4[%c0_6, %c0_7] : memref<128x768xbf16, #tpu.memory_space<vmem>>, vector<128x768xbf16>
    %cst_8 = arith.constant dense<0.000000e+00> : vector<8x768xf32>
    %11 = tpu.matmul %9, %10, %cst_8 {dimension_numbers = #tpu.dot_dimension_numbers<[1], [0], [0], [1], [0, 0, 1, 1], [], []>} : vector<8x128xbf16>, vector<128x768xbf16>, vector<8x768xf32> -> vector<8x768xf32>
    %c0_9 = arith.constant 0 : index
    %c0_10 = arith.constant 0 : index
    %12 = vector.load %arg5[%c0_9, %c0_10] : memref<1x768xf32, #tpu.memory_space<vmem>>, vector<1x768xf32>
    %13 = vector.broadcast %12 : vector<1x768xf32> to vector<8x768xf32>
    %14 = arith.addf %11, %13 : vector<8x768xf32>
    %c0_11 = arith.constant 0 : index
    %c0_12 = arith.constant 0 : index
    %15 = vector.load %arg6[%c0_11, %c0_12] : memref<8x768xf32, #tpu.memory_space<vmem>>, vector<8x768xf32>
    tpu.vector_store %arg6[%c0_11, %c0_12], %14 {strides = array<i32>} : memref<8x768xf32, #tpu.memory_space<vmem>>, vector<8x768xf32>,
    return
  }
  func.func @transform_0(%arg0: i32) -> (i32, i32) {
    %c0_i32 = arith.constant 0 : i32
    %c0_i32_0 = arith.constant 0 : i32
    return %arg0, %c0_i32 : i32, i32
  }
  func.func @transform_1(%arg0: i32) -> (i32, i32) {
    %c0_i32 = arith.constant 0 : i32
    %c0_i32_0 = arith.constant 0 : i32
    %c0_i32_1 = arith.constant 0 : i32
    return %c0_i32, %c0_i32_0 : i32, i32
  }
  func.func @transform_2(%arg0: i32) -> (i32, i32) {
    %c0_i32 = arith.constant 0 : i32
    %c0_i32_0 = arith.constant 0 : i32
    %c0_i32_1 = arith.constant 0 : i32
    return %c0_i32, %c0_i32_0 : i32, i32
  }
  func.func @transform_3(%arg0: i32) -> (i32, i32) {
    %c0_i32 = arith.constant 0 : i32
    %c0_i32_0 = arith.constant 0 : i32
    %c0_i32_1 = arith.constant 0 : i32
    return %c0_i32, %c0_i32_0 : i32, i32
  }
  func.func @transform_4(%arg0: i32) -> (i32, i32) {
    %c0_i32 = arith.constant 0 : i32
    %c0_i32_0 = arith.constant 0 : i32
    %c0_i32_1 = arith.constant 0 : i32
    return %c0_i32, %c0_i32_0 : i32, i32
  }
  func.func @transform_5(%arg0: i32) -> (i32, i32) {
    %c0_i32 = arith.constant 0 : i32
    %c0_i32_0 = arith.constant 0 : i32
    return %arg0, %c0_i32 : i32, i32
  }
}

</mosaic_0001>

<llo_original>
// kernel: tpu_custom_call.1
$region0: #{tpu_custom_call.1}
  #allocation0 [shape = 'u32[]', space=smem, size = 0x4, offset = 0x4, fixed_abs, tag = 'smem constant byte address 0x4 - core index']
  #allocation1 [shape = 'u32[144,128]{1,0:T(1,128)}', space=vmem, size = 0x12000, scoped, tag = 'internal scratch']
  %s0 = inlined_call_operand.hbm [shape: f32[8,32], index: 0, kind: input, shape index: {}]
  %s1 = inlined_call_operand.hbm [shape: bf16[32,128], index: 1, kind: input, shape index: {}]
  %s2 = inlined_call_operand.vmem [shape: f32[1,128], index: 2, kind: input, shape index: {}]
  %s3 = inlined_call_operand.hbm [shape: bf16[128,768], index: 3, kind: input, shape index: {}]
  %s4 = inlined_call_operand.vmem [shape: f32[1,768], index: 4, kind: input, shape index: {}]
  %s5 = inlined_call_operand.hbm [shape: f32[8,768], index: 5, kind: output, shape index: {}]
  %s6 = sld [smem:[#allocation0]]
  $region42: #{tpu_custom_call.1} parent=0
    _
  %s8 = ssub.s32 1, %s6
  %s9 = scalar_select 0, %s8, %s6
  $region1: #{tpu_custom_call.1} parent=0
    #allocation2 [shape = 'u8[4096]{0}', space=vmem, size = 0x1000, scoped, tag = 'input window, operand 0, single buffered']
    #allocation3 [shape = 's32[1]{0}', space=sflag, size = 0x4, scoped, tag = 'scoped memory for tpu_custom_call.1']
    #allocation4 [shape = 's32[1]{0}', space=sflag, size = 0x4, scoped, tag = 'scoped memory for tpu_custom_call.1']
    #allocation5 [shape = 'u8[8192]{0}', space=vmem, size = 0x2000, scoped, tag = 'input window, operand 1, single buffered']
    #allocation6 [shape = 's32[1]{0}', space=sflag, size = 0x4, scoped, tag = 'scoped memory for tpu_custom_call.1']
    #allocation7 [shape = 'u8[196608]{0}', space=vmem, size = 0x30000, scoped, tag = 'input window, operand 3, single buffered']
    #allocation8 [shape = 'u8[24576]{0}', space=vmem, size = 0x6000, scoped, tag = 'output window, operand 0, single buffered']
    %10 = vsyncpa [#allocation3], 0
    %11 = vsyncpa [#allocation6], 0
    %12 = vsyncpa [#allocation4], 0
    // Predicated region
    $region2: #{tpu_custom_call.1} parent=1 // pred_check
      _
    $region3: #{tpu_custom_call.1} parent=1 // pred_check_branch
      %14 = sbr.rel (0) target = $region5
    $region4: #{tpu_custom_call.1} parent=1 // pred_region
      %s16 = ssub.s32 128, 128
      %17 = vsyncadd [#allocation3], %s16
      %s19 = sshll.u32 [#allocation2], 4
      %s20 = int_to_ptr.vmem [resolvable:$true] %s19
      %22 = dma.hbm_to_vmem [thread:$0]  %s0, 128, %s20, [#allocation3]
    $region5: #{tpu_custom_call.1} parent=1 // pred_fallthru
      _
    // Predicated region
    $region6: #{tpu_custom_call.1} parent=1 // pred_check
      _
    $region7: #{tpu_custom_call.1} parent=1 // pred_check_branch
      %24 = sbr.rel (0) target = $region9
    $region8: #{tpu_custom_call.1} parent=1 // pred_region
      %s26 = ssub.s32 256, 256
      %27 = vsyncadd [#allocation6], %s26
      %s28 = sshll.u32 [#allocation5], 4
      %s29 = int_to_ptr.vmem [resolvable:$true] %s28
      %34 = dma.hbm_to_vmem [thread:$0]  %s1, 256, %s29, [#allocation6], 64, 64, 4
    $region9: #{tpu_custom_call.1} parent=1 // pred_fallthru
      _
    // Predicated region
    $region10: #{tpu_custom_call.1} parent=1 // pred_check
      _
    $region11: #{tpu_custom_call.1} parent=1 // pred_check_branch
      %36 = sbr.rel (0) target = $region13
    $region12: #{tpu_custom_call.1} parent=1 // pred_region
      _
    $region13: #{tpu_custom_call.1} parent=1 // pred_fallthru
      _
    // Predicated region
    $region14: #{tpu_custom_call.1} parent=1 // pred_check
      _
    $region15: #{tpu_custom_call.1} parent=1 // pred_check_branch
      %38 = sbr.rel (0) target = $region17
    $region16: #{tpu_custom_call.1} parent=1 // pred_region
      %s40 = ssub.s32 6144, 6144
      %41 = vsyncadd [#allocation6], %s40
      %s42 = sshll.u32 [#allocation7], 4
      %s43 = int_to_ptr.vmem [resolvable:$true] %s42
      %48 = dma.hbm_to_vmem [thread:$0]  %s3, 6144, %s43, [#allocation6], 384, 384, 24
    $region17: #{tpu_custom_call.1} parent=1 // pred_fallthru
      _
    // Predicated region
    $region18: #{tpu_custom_call.1} parent=1 // pred_check
      _
    $region19: #{tpu_custom_call.1} parent=1 // pred_check_branch
      %50 = sbr.rel (0) target = $region21
    $region20: #{tpu_custom_call.1} parent=1 // pred_region
      _
    $region21: #{tpu_custom_call.1} parent=1 // pred_fallthru
      _
    // Predicated region
    $region22: #{tpu_custom_call.1} parent=1 // pred_check
      _
    $region23: #{tpu_custom_call.1} parent=1 // pred_check_branch
      %52 = sbr.rel (0) target = $region25
    $region24: #{tpu_custom_call.1} parent=1 // pred_region
      %53 = dma.done [#allocation3], 128
    $region25: #{tpu_custom_call.1} parent=1 // pred_fallthru
      _
    // Predicated region
    $region26: #{tpu_custom_call.1} parent=1 // pred_check
      _
    $region27: #{tpu_custom_call.1} parent=1 // pred_check_branch
      %55 = sbr.rel (0) target = $region29
    $region28: #{tpu_custom_call.1} parent=1 // pred_region
      %56 = dma.done [#allocation6], 256
    $region29: #{tpu_custom_call.1} parent=1 // pred_fallthru
      _
    // Predicated region
    $region30: #{tpu_custom_call.1} parent=1 // pred_check
      _
    $region31: #{tpu_custom_call.1} parent=1 // pred_check_branch
      %58 = sbr.rel (0) target = $region33
    $region32: #{tpu_custom_call.1} parent=1 // pred_region
      %59 = dma.done [#allocation6], 6144
    $region33: #{tpu_custom_call.1} parent=1 // pred_fallthru
      _
    %v61 = vld [vmem:[#allocation2] sm:$0xff]
    %v62 = vpack.c.bf16 %v61, %v61
    %v63 = vld [vmem:[#allocation5] sm:$0xf]
    %v64 = vld [vmem:[#allocation5 + $0x4] sm:$0xf]
    %v65 = vld [vmem:[#allocation5 + $0x8] sm:$0xf]
    %v66 = vld [vmem:[#allocation5 + $0xc] sm:$0xf]
    %v67 = vld [vmem:[%s2] sm:$0x1]
    %v69 = vlaneseq
    %v70 = vshrl.u32 %v69, 7
    %v71 = vsub.s32 0, %v70
    %v72 = vrot.slane %v67, %v71
    %v78 = vunpack.c.l.b16 %v63
    %v79 = vunpack.c.l.b16 %v64
    %v80 = vunpack.c.l.b16 %v65
    %v81 = vunpack.c.l.b16 %v66
    %v82 = vpack.c.b16 %v79, %v78
    %v83 = vpack.c.b16 %v81, %v80
    %vm86 = vcmask 261120
    %v88 = vsel %vm86, %v62, 0
    %90 = vmatprep.subr.bf16.mxu0 0
    %91 = vmatpush1.bf16.msra.mxu0 %v82
    %92 = vmatprep.subr.bf16.mxu0 0
    %93 = vmatpush1.bf16.msra.mxu0 %v83
    %94 = vmatprep.subr.bf16.mxu0 0
    %95 = vmatpush1.bf16.msra.mxu0 0
    %96 = vmatprep.subr.bf16.mxu0 0
    %97 = vmatpush1.bf16.msra.mxu0 0
    %98 = vmatprep.subr.bf16.mxu0 0
    %99 = vmatpush1.bf16.msra.mxu0 0
    %100 = vmatprep.subr.bf16.mxu0 0
    %101 = vmatpush1.bf16.msra.mxu0 0
    %102 = vmatprep.subr.bf16.mxu0 0
    %103 = vmatpush1.bf16.msra.mxu0 0
    %104 = vmatprep.subr.bf16.mxu0 0
    %105 = vmatpush1.bf16.msra.mxu0 0
    %106 = vmatprep.subr.bf16.mxu0 0
    %107 = vmatpush1.bf16.msra.mxu0 0
    %108 = vmatprep.subr.bf16.mxu0 0
    %109 = vmatpush1.bf16.msra.mxu0 0
    %110 = vmatprep.subr.bf16.mxu0 0
    %111 = vmatpush1.bf16.msra.mxu0 0
    %112 = vmatprep.subr.bf16.mxu0 0
    %113 = vmatpush1.bf16.msra.mxu0 0
    %114 = vmatprep.subr.bf16.mxu0 0
    %115 = vmatpush1.bf16.msra.mxu0 0
    %116 = vmatprep.subr.bf16.mxu0 0
    %117 = vmatpush1.bf16.msra.mxu0 0
    %118 = vmatprep.subr.bf16.mxu0 0
    %119 = vmatpush1.bf16.msra.mxu0 0
    %120 = vmatprep.subr.bf16.mxu0 0
    %121 = vmatpush1.bf16.msra.mxu0 0
    %122 = vmatprep.mubr.bf16.mxu0 0
    %123 = vmatmul.mubr.bf16.gmra.mrb[0].mxu0 %v88
    %v124 = vpop.f32.mrb[0].mxu0
    %v125 = vadd.f32 %v72, %v124
    %v126 = vpop.f32.mrb[0].mxu0
    %v127 = vpop.f32.mrb[0].mxu0
    %v128 = vpop.f32.mrb[0].mxu0
    %129 = vdwg.mxu0
    %v130 = vmax.f32 %v125, 0.0
    %v131 = vpack.c.bf16 %v130, %v130
    %v132 = vld [vmem:[#allocation7] sm:$0xff]
    %v133 = vld [vmem:[#allocation7 + $0x8] sm:$0xff]
    %v134 = vld [vmem:[#allocation7 + $0x10] sm:$0xff]
    %v135 = vld [vmem:[#allocation7 + $0x18] sm:$0xff]
    %v136 = vld [vmem:[#allocation7 + $0x20] sm:$0xff]
    %v137 = vld [vmem:[#allocation7 + $0x28] sm:$0xff]
    %v138 = vld [vmem:[#allocation7 + $0x30] sm:$0xff]
    %v139 = vld [vmem:[#allocation7 + $0x38] sm:$0xff]
    %v140 = vld [vmem:[#allocation7 + $0x40] sm:$0xff]
    %v141 = vld [vmem:[#allocation7 + $0x48] sm:$0xff]
    %v142 = vld [vmem:[#allocation7 + $0x50] sm:$0xff]
    %v143 = vld [vmem:[#allocation7 + $0x58] sm:$0xff]
    %v144 = vld [vmem:[#allocation7 + $0x60] sm:$0xff]
    %v145 = vld [vmem:[#allocation7 + $0x68] sm:$0xff]
    %v146 = vld [vmem:[#allocation7 + $0x70] sm:$0xff]
    %v147 = vld [vmem:[#allocation7 + $0x78] sm:$0xff]
    %v148 = vld [vmem:[#allocation7 + $0x80] sm:$0xff]
    %v149 = vld [vmem:[#allocation7 + $0x88] sm:$0xff]
    %v150 = vld [vmem:[#allocation7 + $0x90] sm:$0xff]
    %v151 = vld [vmem:[#allocation7 + $0x98] sm:$0xff]
    %v152 = vld [vmem:[#allocation7 + $0xa0] sm:$0xff]
    %v153 = vld [vmem:[#allocation7 + $0xa8] sm:$0xff]
    %v154 = vld [vmem:[#allocation7 + $0xb0] sm:$0xff]
    %v155 = vld [vmem:[#allocation7 + $0xb8] sm:$0xff]
    %v156 = vld [vmem:[#allocation7 + $0xc0] sm:$0xff]
    %v157 = vld [vmem:[#allocation7 + $0xc8] sm:$0xff]
    %v158 = vld [vmem:[#allocation7 + $0xd0] sm:$0xff]
    %v159 = vld [vmem:[#allocation7 + $0xd8] sm:$0xff]
    %v160 = vld [vmem:[#allocation7 + $0xe0] sm:$0xff]
    %v161 = vld [vmem:[#allocation7 + $0xe8] sm:$0xff]
    %v162 = vld [vmem:[#allocation7 + $0xf0] sm:$0xff]
    %v163 = vld [vmem:[#allocation7 + $0xf8] sm:$0xff]
    %v164 = vld [vmem:[#allocation7 + $0x100] sm:$0xff]
    %v165 = vld [vmem:[#allocation7 + $0x108] sm:$0xff]
    %v166 = vld [vmem:[#allocation7 + $0x110] sm:$0xff]
    %v167 = vld [vmem:[#allocation7 + $0x118] sm:$0xff]
    %v168 = vld [vmem:[#allocation7 + $0x120] sm:$0xff]
    %v169 = vld [vmem:[#allocation7 + $0x128] sm:$0xff]
    %v170 = vld [vmem:[#allocation7 + $0x130] sm:$0xff]
    %v171 = vld [vmem:[#allocation7 + $0x138] sm:$0xff]
    %v172 = vld [vmem:[#allocation7 + $0x140] sm:$0xff]
    %v173 = vld [vmem:[#allocation7 + $0x148] sm:$0xff]
    %v174 = vld [vmem:[#allocation7 + $0x150] sm:$0xff]
    %v175 = vld [vmem:[#allocation7 + $0x158] sm:$0xff]
    %v176 = vld [vmem:[#allocation7 + $0x160] sm:$0xff]
    %v177 = vld [vmem:[#allocation7 + $0x168] sm:$0xff]
    %v178 = vld [vmem:[#allocation7 + $0x170] sm:$0xff]
    %v179 = vld [vmem:[#allocation7 + $0x178] sm:$0xff]
    %v180 = vld [vmem:[%s4] sm:$0x3f]
    %v182 = vlaneseq
    %v183 = vshrl.u32 %v182, 7
    %v184 = vsub.s32 0, %v183
    %v185 = vrot.slane %v180, %v184
    %v186 = vlaneseq
    %v187 = vshrl.u32 %v186, 7
    %v188 = vsub.s32 1, %v187
    %v189 = vrot.slane %v180, %v188
    %v190 = vlaneseq
    %v191 = vshrl.u32 %v190, 7
    %v192 = vsub.s32 2, %v191
    %v193 = vrot.slane %v180, %v192
    %v194 = vlaneseq
    %v195 = vshrl.u32 %v194, 7
    %v196 = vsub.s32 3, %v195
    %v197 = vrot.slane %v180, %v196
    %v198 = vlaneseq
    %v199 = vshrl.u32 %v198, 7
    %v200 = vsub.s32 4, %v199
    %v201 = vrot.slane %v180, %v200
    %v202 = vlaneseq
    %v203 = vshrl.u32 %v202, 7
    %v204 = vsub.s32 5, %v203
    %v205 = vrot.slane %v180, %v204
    %v260 = vunpack.c.l.b16 %v132
    %v261 = vunpack.c.h.b16 %v132
    %v262 = vunpack.c.l.b16 %v133
    %v263 = vunpack.c.h.b16 %v133
    %v264 = vunpack.c.l.b16 %v134
    %v265 = vunpack.c.h.b16 %v134
    %v266 = vunpack.c.l.b16 %v135
    %v267 = vunpack.c.h.b16 %v135
    %v268 = vunpack.c.l.b16 %v136
    %v269 = vunpack.c.h.b16 %v136
    %v270 = vunpack.c.l.b16 %v137
    %v271 = vunpack.c.h.b16 %v137
    %v272 = vunpack.c.l.b16 %v138
    %v273 = vunpack.c.h.b16 %v138
    %v274 = vunpack.c.l.b16 %v139
    %v275 = vunpack.c.h.b16 %v139
    %v276 = vunpack.c.l.b16 %v140
    %v277 = vunpack.c.h.b16 %v140
    %v278 = vunpack.c.l.b16 %v141
    %v279 = vunpack.c.h.b16 %v141
    %v280 = vunpack.c.l.b16 %v142
    %v281 = vunpack.c.h.b16 %v142
    %v282 = vunpack.c.l.b16 %v143
    %v283 = vunpack.c.h.b16 %v143
    %v284 = vunpack.c.l.b16 %v144
    %v285 = vunpack.c.h.b16 %v144
    %v286 = vunpack.c.l.b16 %v145
    %v287 = vunpack.c.h.b16 %v145
    %v288 = vunpack.c.l.b16 %v146
    %v289 = vunpack.c.h.b16 %v146
    %v290 = vunpack.c.l.b16 %v147
    %v291 = vunpack.c.h.b16 %v147
    %v292 = vunpack.c.l.b16 %v148
    %v293 = vunpack.c.h.b16 %v148
    %v294 = vunpack.c.l.b16 %v149
    %v295 = vunpack.c.h.b16 %v149
    %v296 = vunpack.c.l.b16 %v150
    %v297 = vunpack.c.h.b16 %v150
    %v298 = vunpack.c.l.b16 %v151
    %v299 = vunpack.c.h.b16 %v151
    %v300 = vunpack.c.l.b16 %v152
    %v301 = vunpack.c.h.b16 %v152
    %v302 = vunpack.c.l.b16 %v153
    %v303 = vunpack.c.h.b16 %v153
    %v304 = vunpack.c.l.b16 %v154
    %v305 = vunpack.c.h.b16 %v154
    %v306 = vunpack.c.l.b16 %v155
    %v307 = vunpack.c.h.b16 %v155
    %v308 = vunpack.c.l.b16 %v156
    %v309 = vunpack.c.h.b16 %v156
    %v310 = vunpack.c.l.b16 %v157
    %v311 = vunpack.c.h.b16 %v157
    %v312 = vunpack.c.l.b16 %v158
    %v313 = vunpack.c.h.b16 %v158
    %v314 = vunpack.c.l.b16 %v159
    %v315 = vunpack.c.h.b16 %v159
    %v316 = vunpack.c.l.b16 %v160
    %v317 = vunpack.c.h.b16 %v160
    %v318 = vunpack.c.l.b16 %v161
    %v319 = vunpack.c.h.b16 %v161
    %v320 = vunpack.c.l.b16 %v162
    %v321 = vunpack.c.h.b16 %v162
    %v322 = vunpack.c.l.b16 %v163
    %v323 = vunpack.c.h.b16 %v163
    %v324 = vunpack.c.l.b16 %v164
    %v325 = vunpack.c.h.b16 %v164
    %v326 = vunpack.c.l.b16 %v165
    %v327 = vunpack.c.h.b16 %v165
    %v328 = vunpack.c.l.b16 %v166
    %v329 = vunpack.c.h.b16 %v166
    %v330 = vunpack.c.l.b16 %v167
    %v331 = vunpack.c.h.b16 %v167
    %v332 = vunpack.c.l.b16 %v168
    %v333 = vunpack.c.h.b16 %v168
    %v334 = vunpack.c.l.b16 %v169
    %v335 = vunpack.c.h.b16 %v169
    %v336 = vunpack.c.l.b16 %v170
    %v337 = vunpack.c.h.b16 %v170
    %v338 = vunpack.c.l.b16 %v171
    %v339 = vunpack.c.h.b16 %v171
    %v340 = vunpack.c.l.b16 %v172
    %v341 = vunpack.c.h.b16 %v172
    %v342 = vunpack.c.l.b16 %v173
    %v343 = vunpack.c.h.b16 %v173
    %v344 = vunpack.c.l.b16 %v174
    %v345 = vunpack.c.h.b16 %v174
    %v346 = vunpack.c.l.b16 %v175
    %v347 = vunpack.c.h.b16 %v175
    %v348 = vunpack.c.l.b16 %v176
    %v349 = vunpack.c.h.b16 %v176
    %v350 = vunpack.c.l.b16 %v177
    %v351 = vunpack.c.h.b16 %v177
    %v352 = vunpack.c.l.b16 %v178
    %v353 = vunpack.c.h.b16 %v178
    %v354 = vunpack.c.l.b16 %v179
    %v355 = vunpack.c.h.b16 %v179
    %v356 = vpack.c.b16 %v266, %v260
    %v357 = vpack.c.b16 %v267, %v261
    %v358 = vpack.c.b16 %v268, %v262
    %v359 = vpack.c.b16 %v269, %v263
    %v360 = vpack.c.b16 %v270, %v264
    %v361 = vpack.c.b16 %v271, %v265
    %v362 = vpack.c.b16 %v278, %v272
    %v363 = vpack.c.b16 %v279, %v273
    %v364 = vpack.c.b16 %v280, %v274
    %v365 = vpack.c.b16 %v281, %v275
    %v366 = vpack.c.b16 %v282, %v276
    %v367 = vpack.c.b16 %v283, %v277
    %v368 = vpack.c.b16 %v290, %v284
    %v369 = vpack.c.b16 %v291, %v285
    %v370 = vpack.c.b16 %v292, %v286
    %v371 = vpack.c.b16 %v293, %v287
    %v372 = vpack.c.b16 %v294, %v288
    %v373 = vpack.c.b16 %v295, %v289
    %v374 = vpack.c.b16 %v302, %v296
    %v375 = vpack.c.b16 %v303, %v297
    %v376 = vpack.c.b16 %v304, %v298
    %v377 = vpack.c.b16 %v305, %v299
    %v378 = vpack.c.b16 %v306, %v300
    %v379 = vpack.c.b16 %v307, %v301
    %v380 = vpack.c.b16 %v314, %v308
    %v381 = vpack.c.b16 %v315, %v309
    %v382 = vpack.c.b16 %v316, %v310
    %v383 = vpack.c.b16 %v317, %v311
    %v384 = vpack.c.b16 %v318, %v312
    %v385 = vpack.c.b16 %v319, %v313
    %v386 = vpack.c.b16 %v326, %v320
    %v387 = vpack.c.b16 %v327, %v321
    %v388 = vpack.c.b16 %v328, %v322
    %v389 = vpack.c.b16 %v329, %v323
    %v390 = vpack.c.b16 %v330, %v324
    %v391 = vpack.c.b16 %v331, %v325
    %v392 = vpack.c.b16 %v338, %v332
    %v393 = vpack.c.b16 %v339, %v333
    %v394 = vpack.c.b16 %v340, %v334
    %v395 = vpack.c.b16 %v341, %v335
    %v396 = vpack.c.b16 %v342, %v336
    %v397 = vpack.c.b16 %v343, %v337
    %v398 = vpack.c.b16 %v350, %v344
    %v399 = vpack.c.b16 %v351, %v345
    %v400 = vpack.c.b16 %v352, %v346
    %v401 = vpack.c.b16 %v353, %v347
    %v402 = vpack.c.b16 %v354, %v348
    %v403 = vpack.c.b16 %v355, %v349
    %452 = vmatprep.subr.bf16.mxu0 %v357
    %453 = vmatpush1.bf16.msra.mxu0 %v356
    %454 = vmatprep.subr.bf16.mxu0 %v363
    %455 = vmatpush1.bf16.msra.mxu0 %v362
    %456 = vmatprep.subr.bf16.mxu0 %v369
    %457 = vmatpush1.bf16.msra.mxu0 %v368
    %458 = vmatprep.subr.bf16.mxu0 %v375
    %459 = vmatpush1.bf16.msra.mxu0 %v374
    %460 = vmatprep.subr.bf16.mxu0 %v381
    %461 = vmatpush1.bf16.msra.mxu0 %v380
    %462 = vmatprep.subr.bf16.mxu0 %v387
    %463 = vmatpush1.bf16.msra.mxu0 %v386
    %464 = vmatprep.subr.bf16.mxu0 %v393
    %465 = vmatpush1.bf16.msra.mxu0 %v392
    %466 = vmatprep.subr.bf16.mxu0 %v399
    %467 = vmatpush1.bf16.msra.mxu0 %v398
    %468 = vmatprep.subr.bf16.mxu0 0
    %469 = vmatpush1.bf16.msra.mxu0 0
    %470 = vmatprep.subr.bf16.mxu0 0
    %471 = vmatpush1.bf16.msra.mxu0 0
    %472 = vmatprep.subr.bf16.mxu0 0
    %473 = vmatpush1.bf16.msra.mxu0 0
    %474 = vmatprep.subr.bf16.mxu0 0
    %475 = vmatpush1.bf16.msra.mxu0 0
    %476 = vmatprep.subr.bf16.mxu0 0
    %477 = vmatpush1.bf16.msra.mxu0 0
    %478 = vmatprep.subr.bf16.mxu0 0
    %479 = vmatpush1.bf16.msra.mxu0 0
    %480 = vmatprep.subr.bf16.mxu0 0
    %481 = vmatpush1.bf16.msra.mxu0 0
    %482 = vmatprep.subr.bf16.mxu0 0
    %483 = vmatpush1.bf16.msra.mxu0 0
    %484 = vmatprep.mubr.bf16.mxu0 0
    %485 = vmatmul.mubr.bf16.gmra.mrb[0].mxu0 %v131
    %v486 = vpop.f32.mrb[0].mxu0
    %v487 = vadd.f32 %v185, %v486
    %v488 = vpop.f32.mrb[0].mxu0
    %v489 = vadd.f32 %v189, %v488
    %v490 = vpop.f32.mrb[0].mxu0
    %v491 = vpop.f32.mrb[0].mxu0
    %492 = vdwg.mxu0
    %493 = vmatprep.subr.bf16.mxu0 %v359
    %494 = vmatpush1.bf16.msra.mxu0 %v358
    %495 = vmatprep.subr.bf16.mxu0 %v365
    %496 = vmatpush1.bf16.msra.mxu0 %v364
    %497 = vmatprep.subr.bf16.mxu0 %v371
    %498 = vmatpush1.bf16.msra.mxu0 %v370
    %499 = vmatprep.subr.bf16.mxu0 %v377
    %500 = vmatpush1.bf16.msra.mxu0 %v376
    %501 = vmatprep.subr.bf16.mxu0 %v383
    %502 = vmatpush1.bf16.msra.mxu0 %v382
    %503 = vmatprep.subr.bf16.mxu0 %v389
    %504 = vmatpush1.bf16.msra.mxu0 %v388
    %505 = vmatprep.subr.bf16.mxu0 %v395
    %506 = vmatpush1.bf16.msra.mxu0 %v394
    %507 = vmatprep.subr.bf16.mxu0 %v401
    %508 = vmatpush1.bf16.msra.mxu0 %v400
    %509 = vmatprep.subr.bf16.mxu0 0
    %510 = vmatpush1.bf16.msra.mxu0 0
    %511 = vmatprep.subr.bf16.mxu0 0
    %512 = vmatpush1.bf16.msra.mxu0 0
    %513 = vmatprep.subr.bf16.mxu0 0
    %514 = vmatpush1.bf16.msra.mxu0 0
    %515 = vmatprep.subr.bf16.mxu0 0
    %516 = vmatpush1.bf16.msra.mxu0 0
    %517 = vmatprep.subr.bf16.mxu0 0
    %518 = vmatpush1.bf16.msra.mxu0 0
    %519 = vmatprep.subr.bf16.mxu0 0
    %520 = vmatpush1.bf16.msra.mxu0 0
    %521 = vmatprep.subr.bf16.mxu0 0
    %522 = vmatpush1.bf16.msra.mxu0 0
    %523 = vmatprep.subr.bf16.mxu0 0
    %524 = vmatpush1.bf16.msra.mxu0 0
    %525 = vmatprep.mubr.bf16.mxu0 0
    %526 = vmatmul.mubr.bf16.gmra.mrb[0].mxu0 %v131
    %v527 = vpop.f32.mrb[0].mxu0
    %v528 = vadd.f32 %v193, %v527
    %v529 = vpop.f32.mrb[0].mxu0
    %v530 = vadd.f32 %v197, %v529
    %v531 = vpop.f32.mrb[0].mxu0
    %v532 = vpop.f32.mrb[0].mxu0
    %533 = vdwg.mxu0
    %534 = vmatprep.subr.bf16.mxu0 %v361
    %535 = vmatpush1.bf16.msra.mxu0 %v360
    %536 = vmatprep.subr.bf16.mxu0 %v367
    %537 = vmatpush1.bf16.msra.mxu0 %v366
    %538 = vmatprep.subr.bf16.mxu0 %v373
    %539 = vmatpush1.bf16.msra.mxu0 %v372
    %540 = vmatprep.subr.bf16.mxu0 %v379
    %541 = vmatpush1.bf16.msra.mxu0 %v378
    %542 = vmatprep.subr.bf16.mxu0 %v385
    %543 = vmatpush1.bf16.msra.mxu0 %v384
    %544 = vmatprep.subr.bf16.mxu0 %v391
    %545 = vmatpush1.bf16.msra.mxu0 %v390
    %546 = vmatprep.subr.bf16.mxu0 %v397
    %547 = vmatpush1.bf16.msra.mxu0 %v396
    %548 = vmatprep.subr.bf16.mxu0 %v403
    %549 = vmatpush1.bf16.msra.mxu0 %v402
    %550 = vmatprep.subr.bf16.mxu0 0
    %551 = vmatpush1.bf16.msra.mxu0 0
    %552 = vmatprep.subr.bf16.mxu0 0
    %553 = vmatpush1.bf16.msra.mxu0 0
    %554 = vmatprep.subr.bf16.mxu0 0
    %555 = vmatpush1.bf16.msra.mxu0 0
    %556 = vmatprep.subr.bf16.mxu0 0
    %557 = vmatpush1.bf16.msra.mxu0 0
    %558 = vmatprep.subr.bf16.mxu0 0
    %559 = vmatpush1.bf16.msra.mxu0 0
    %560 = vmatprep.subr.bf16.mxu0 0
    %561 = vmatpush1.bf16.msra.mxu0 0
    %562 = vmatprep.subr.bf16.mxu0 0
    %563 = vmatpush1.bf16.msra.mxu0 0
    %564 = vmatprep.subr.bf16.mxu0 0
    %565 = vmatpush1.bf16.msra.mxu0 0
    %566 = vmatprep.mubr.bf16.mxu0 0
    %567 = vmatmul.mubr.bf16.gmra.mrb[0].mxu0 %v131
    %v568 = vpop.f32.mrb[0].mxu0
    %v569 = vadd.f32 %v201, %v568
    %v570 = vpop.f32.mrb[0].mxu0
    %v571 = vadd.f32 %v205, %v570
    %v572 = vpop.f32.mrb[0].mxu0
    %v573 = vpop.f32.mrb[0].mxu0
    %574 = vdwg.mxu0
    %575 = vst [vmem:[#allocation8] sm:$0xff] %v487
    %576 = vst [vmem:[#allocation8 + $0x8] sm:$0xff] %v489
    %577 = vst [vmem:[#allocation8 + $0x10] sm:$0xff] %v528
    %578 = vst [vmem:[#allocation8 + $0x18] sm:$0xff] %v530
    %579 = vst [vmem:[#allocation8 + $0x20] sm:$0xff] %v569
    %580 = vst [vmem:[#allocation8 + $0x28] sm:$0xff] %v571
    // Predicated region
    $region34: #{tpu_custom_call.1} parent=1 // pred_check
      _
    $region35: #{tpu_custom_call.1} parent=1 // pred_check_branch
      %582 = sbr.rel (0) target = $region37
    $region36: #{tpu_custom_call.1} parent=1 // pred_region
      %s584 = ssub.s32 768, 768
      %585 = vsyncadd [#allocation4], %s584
      %s587 = sshll.u32 [#allocation8], 4
      %s588 = int_to_ptr.vmem [resolvable:$true] %s587
      %590 = dma.vmem_to_hbm [thread:$0]  %s588, 768, %s5, [#allocation4]
    $region37: #{tpu_custom_call.1} parent=1 // pred_fallthru
      _
    // Predicated region
    $region38: #{tpu_custom_call.1} parent=1 // pred_check
      _
    $region39: #{tpu_custom_call.1} parent=1 // pred_check_branch
      %592 = sbr.rel (0) target = $region41
    $region40: #{tpu_custom_call.1} parent=1 // pred_region
      %593 = dma.done [#allocation4], 768
    $region41: #{tpu_custom_call.1} parent=1 // pred_fallthru
      _
    %594 = vsyncpa [#allocation3], 1
    %595 = vsyncpa [#allocation6], 1
    %596 = vsyncpa [#allocation4], 1

</llo_original>
